<compile_context>
chip_gen: v5e
topology: v5e:2x2
jax: 0.10.0
libtpu: 0.0.40
codegen_flags: <defaults>
</compile_context>

<pallas_src>
import jax
import jax.numpy as jnp
from jax.experimental import pallas as pl
from jax.experimental.pallas import tpu as pltpu


def pack_params(p):
    """Fuse / cast parameters for the kernel.

    Weights stored as (in, out); biases as (1, out), all f32.
    Returns bf16 weights + f32 biases:
      w1 (D, H), b1 (1, H)
      wh (H, 2H)     = [wa1 | wv1],  bh (1, 2H) = [ba1 | bv1]
      wt (2H, A + 1) = [[wa2, 0], [0, wv2]],  bt (1, A + 1) = [ba2 | bv2]
    """
    H = p["wa1"].shape[0]
    A = p["wa2"].shape[1]

    w1 = p["w1"].astype(jnp.bfloat16)
    b1 = p["b1"].astype(jnp.float32)

    wh = jnp.concatenate([p["wa1"], p["wv1"]], axis=1).astype(jnp.bfloat16)
    bh = jnp.concatenate([p["ba1"], p["bv1"]], axis=1).astype(jnp.float32)

    wt = jnp.zeros((2 * H, A + 1), jnp.float32)
    wt = wt.at[:H, :A].set(p["wa2"]).at[H:, A:].set(p["wv2"]).astype(jnp.bfloat16)
    bt = jnp.concatenate([p["ba2"], p["bv2"]], axis=1).astype(jnp.float32)
    return w1, b1, wh, bh, wt, bt


def dueling_mlp_forward(x, params, tile_rows=4096):
    """x: (B, D) float32. Returns q: (B, A) float32."""
    B, D = x.shape
    w1, b1, wh, bh, wt, bt = pack_params(params)
    A = bt.shape[1] - 1

    # Batch tile: multiple of 8 sublanes; aim for >=2 grid steps so both v7x
    # TensorCores get work (harmless no-op on single-TC v5e / v6e).
    half = -(-B // 2)
    tb = min(tile_rows, max(8, ((half + 7) // 8) * 8))
    n_tiles = pl.cdiv(B, tb)

    def kernel(x_ref, w1_ref, b1_ref, wh_ref, bh_ref, wt_ref, bt_ref,
               out_ref, psum_ref):
        # x tile arrives f32; cast to bf16 in-body (MXU native, no extra HBM pass).
        xt = x_ref[...].astype(jnp.bfloat16)

        # feature trunk: Linear(D, 64) + ReLU   (f32 accumulation)
        feat = jnp.dot(xt, w1_ref[...], preferred_element_type=jnp.float32) + b1_ref[...]
        feat = jnp.maximum(feat, 0.0).astype(jnp.bfloat16)

        # fused hidden layer of both streams: (TB, 64) @ (64, 128) -> [a_h | v_h]
        h = jnp.dot(feat, wh_ref[...], preferred_element_type=jnp.float32) + bh_ref[...]
        h = jnp.maximum(h, 0.0).astype(jnp.bfloat16)

        # fused tail: block-diagonal (128, A+1) weight -> [adv (A lanes) | val (1 lane)]
        out = jnp.dot(h, wt_ref[...], preferred_element_type=jnp.float32) + bt_ref[...]
        out_ref[...] = out.astype(out_ref.dtype)

        # Per-tile advantage partial sum (f32).  Mask out ragged last-tile rows
        # (rows >= B hold unspecified padding data) and the value column so the
        # global mean matches torch's `advantages.mean()` (no dim) exactly.
        tb_k, w_k = out.shape
        row = jax.lax.broadcasted_iota(jnp.int32, (tb_k, w_k), 0) + pl.program_id(0) * tb_k
        col = jax.lax.broadcasted_iota(jnp.int32, (tb_k, w_k), 1)
        masked = jnp.where((row < B) & (col < A), out, 0.0)
        psum_ref[...] = jnp.broadcast_to(jnp.sum(masked), psum_ref.shape)

    const2 = lambda i: (0, 0)   # weights / biases: resident across all tiles

    flops = 2 * B * (D * 64 + 64 * 128 + 128 * (A + 1))
    bytes_accessed = (4 * B * D + 4 * B * (A + 1)
                      + 2 * (D * 64 + 64 * 128 + 128 * (A + 1))
                      + 4 * n_tiles * 8 * 128)

    out, psums = pl.pallas_call(
        kernel,
        out_shape=(jax.ShapeDtypeStruct((B, A + 1), jnp.float32),
                   jax.ShapeDtypeStruct((n_tiles, 8, 128), jnp.float32)),
        grid=(n_tiles,),
        in_specs=[
            pl.BlockSpec((tb, D), lambda i: (i, 0)),
            pl.BlockSpec(w1.shape, const2),
            pl.BlockSpec(b1.shape, const2),
            pl.BlockSpec(wh.shape, const2),
            pl.BlockSpec(bh.shape, const2),
            pl.BlockSpec(wt.shape, const2),
            pl.BlockSpec(bt.shape, const2),
        ],
        out_specs=(pl.BlockSpec((tb, A + 1), lambda i: (i, 0)),
                   pl.BlockSpec((1, 8, 128), lambda i: (i, 0, 0))),
        compiler_params=pltpu.CompilerParams(
            dimension_semantics=("parallel",)),
        cost_estimate=pl.CostEstimate(flops=flops, transcendentals=0,
                                      bytes_accessed=bytes_accessed),
    )(x, w1, b1, wh, bh, wt, bt)

    adv = out[:, :A]
    val = out[:, A:A + 1]
    # Global mean over ALL adv elements (torch .mean() with no dim) from the
    # in-kernel per-tile partial sums: only n_tiles scalars cross HBM here.
    mean = jnp.sum(psums[:, 0, 0]) / float(B * A)
    return val + (adv - mean)


def init_params(key, input_dim, num_actions, hidden=64):
    """Deterministic synthetic init. Weights stored as (in, out); biases (1, out)."""
    ks = jax.random.split(key, 10)

    def lin(kw, kb, din, dout):
        # mimic torch default: U(-1/sqrt(in), 1/sqrt(in))
        bound = 1.0 / jnp.sqrt(din)
        w = jax.random.uniform(kw, (din, dout), jnp.float32, -bound, bound)
        b = jax.random.uniform(kb, (1, dout), jnp.float32, -bound, bound)
        return w, b

    w1, b1 = lin(ks[0], ks[1], input_dim, hidden)
    wa1, ba1 = lin(ks[2], ks[3], hidden, hidden)
    wa2, ba2 = lin(ks[4], ks[5], hidden, num_actions)
    wv1, bv1 = lin(ks[6], ks[7], hidden, hidden)
    wv2, bv2 = lin(ks[8], ks[9], hidden, 1)
    return dict(w1=w1, b1=b1, wa1=wa1, ba1=ba1, wa2=wa2, ba2=ba2,
                wv1=wv1, bv1=bv1, wv2=wv2, bv2=bv2)


def reference_forward_f32(x, p):
    """Pure-f32 reference matching the PyTorch module."""
    feat = jnp.maximum(x @ p["w1"] + p["b1"], 0.0)
    adv = jnp.maximum(feat @ p["wa1"] + p["ba1"], 0.0) @ p["wa2"] + p["ba2"]
    val = jnp.maximum(feat @ p["wv1"] + p["bv1"], 0.0) @ p["wv2"] + p["bv2"]
    return val + (adv - jnp.mean(adv))


def reference_forward_bf16(x, p):
    """Reference mirroring the kernel's bf16-inputs / f32-accumulation arithmetic."""
    bf, f32 = jnp.bfloat16, jnp.float32
    dot = lambda a, b: jnp.dot(a.astype(bf), b.astype(bf), preferred_element_type=f32)
    feat = jnp.maximum(dot(x, p["w1"]) + p["b1"], 0.0)
    a_h = jnp.maximum(dot(feat, p["wa1"]) + p["ba1"], 0.0)
    v_h = jnp.maximum(dot(feat, p["wv1"]) + p["bv1"], 0.0)
    adv = dot(a_h, p["wa2"]) + p["ba2"]
    val = dot(v_h, p["wv2"]) + p["bv2"]
    return val + (adv - jnp.mean(adv))


if __name__ == "__main__":
    key = jax.random.PRNGKey(0)
    k_x, k_p, k_x2 = jax.random.split(key, 3)

    B, D, A = 8, 16, 4          # small shapes: batch=8, input_dim=16, num_actions=4
    x = jax.random.normal(k_x, (B, D), jnp.float32)
    params = init_params(k_p, D, A)

    q = dueling_mlp_forward(x, params)
    q = jax.block_until_ready(q)
    assert q.shape == (B, A)

    # tight check against a reference using the same bf16/f32 arithmetic
    q_ref_bf16 = reference_forward_bf16(x, params)
    assert jnp.allclose(q, q_ref_bf16, atol=5e-3, rtol=5e-3), \
        f"max diff (bf16 ref) = {jnp.max(jnp.abs(q - q_ref_bf16))}"

    # loose check against the pure-f32 PyTorch-equivalent reference
    q_ref_f32 = reference_forward_f32(x, params)
    assert jnp.allclose(q, q_ref_f32, atol=5e-2, rtol=5e-2), \
        f"max diff (f32 ref) = {jnp.max(jnp.abs(q - q_ref_f32))}"

    # second small case with a ragged last tile (exercises partial-block masking)
    B2 = 50
    x2 = jax.random.normal(k_x2, (B2, D), jnp.float32)
    q2 = jax.block_until_ready(dueling_mlp_forward(x2, params))
    q2_ref = reference_forward_bf16(x2, params)
    assert q2.shape == (B2, A)
    assert jnp.allclose(q2, q2_ref, atol=5e-3, rtol=5e-3), \
        f"max diff (ragged, bf16 ref) = {jnp.max(jnp.abs(q2 - q2_ref))}"

    print("KERNEL_OK")
</pallas_src>

<mosaic_0001>
module attributes {stable_mosaic.version = 11 : i64} {
  func.func @kernel(%arg0: i32, %arg1: memref<8x16xf32, #tpu.memory_space<vmem>>, %arg2: memref<16x64xbf16, #tpu.memory_space<vmem>>, %arg3: memref<1x64xf32, #tpu.memory_space<vmem>>, %arg4: memref<64x128xbf16, #tpu.memory_space<vmem>>, %arg5: memref<1x128xf32, #tpu.memory_space<vmem>>, %arg6: memref<128x5xbf16, #tpu.memory_space<vmem>>, %arg7: memref<1x5xf32, #tpu.memory_space<vmem>>, %arg8: memref<8x5xf32, #tpu.memory_space<vmem>>, %arg9: memref<1x8x128xf32, #tpu.memory_space<vmem>>) attributes {dimension_semantics = [#tpu.dimension_semantics<parallel>], iteration_bounds = array<i64: 1>, scalar_prefetch = 0 : i64, scratch_operands = 0 : i64, tpu.core_type = #tpu.core_type<tc>, window_params = [{transform_indices = @transform_0, window_bounds = array<i64: 8, 16>}, {pipeline_mode = #tpu.pipeline_mode<synchronous>, transform_indices = @transform_1, window_bounds = array<i64: 16, 64>}, {pipeline_mode = #tpu.pipeline_mode<synchronous>, transform_indices = @transform_2, window_bounds = array<i64: 1, 64>}, {pipeline_mode = #tpu.pipeline_mode<synchronous>, transform_indices = @transform_3, window_bounds = array<i64: 64, 128>}, {pipeline_mode = #tpu.pipeline_mode<synchronous>, transform_indices = @transform_4, window_bounds = array<i64: 1, 128>}, {pipeline_mode = #tpu.pipeline_mode<synchronous>, transform_indices = @transform_5, window_bounds = array<i64: 128, 5>}, {pipeline_mode = #tpu.pipeline_mode<synchronous>, transform_indices = @transform_6, window_bounds = array<i64: 1, 5>}, {transform_indices = @transform_7, window_bounds = array<i64: 8, 5>}, {transform_indices = @transform_8, window_bounds = array<i64: 1, 8, 128>}]} {
    %c0 = arith.constant 0 : index
    %c0_0 = arith.constant 0 : index
    %0 = vector.load %arg1[%c0, %c0_0] : memref<8x16xf32, #tpu.memory_space<vmem>>, vector<8x16xf32>
    %1 = arith.truncf %0 : vector<8x16xf32> to vector<8x16xbf16>
    %c0_1 = arith.constant 0 : index
    %c0_2 = arith.constant 0 : index
    %2 = vector.load %arg2[%c0_1, %c0_2] : memref<16x64xbf16, #tpu.memory_space<vmem>>, vector<16x64xbf16>
    %cst = arith.constant dense<0.000000e+00> : vector<8x64xf32>
    %3 = tpu.matmul %1, %2, %cst {dimension_numbers = #tpu.dot_dimension_numbers<[1], [0], [0], [1], [0, 0, 1, 1], [], []>} : vector<8x16xbf16>, vector<16x64xbf16>, vector<8x64xf32> -> vector<8x64xf32>
    %c0_3 = arith.constant 0 : index
    %c0_4 = arith.constant 0 : index
    %4 = vector.load %arg3[%c0_3, %c0_4] : memref<1x64xf32, #tpu.memory_space<vmem>>, vector<1x64xf32>
    %5 = vector.broadcast %4 : vector<1x64xf32> to vector<8x64xf32>
    %6 = arith.addf %3, %5 : vector<8x64xf32>
    %cst_5 = arith.constant 0.000000e+00 : f32
    %7 = vector.broadcast %cst_5 : f32 to vector<8x64xf32>
    %8 = arith.maximumf %6, %7 : vector<8x64xf32>
    %9 = arith.truncf %8 : vector<8x64xf32> to vector<8x64xbf16>
    %c0_6 = arith.constant 0 : index
    %c0_7 = arith.constant 0 : index
    %10 = vector.load %arg4[%c0_6, %c0_7] : memref<64x128xbf16, #tpu.memory_space<vmem>>, vector<64x128xbf16>
    %cst_8 = arith.constant dense<0.000000e+00> : vector<8x128xf32>
    %11 = tpu.matmul %9, %10, %cst_8 {dimension_numbers = #tpu.dot_dimension_numbers<[1], [0], [0], [1], [0, 0, 1, 1], [], []>} : vector<8x64xbf16>, vector<64x128xbf16>, vector<8x128xf32> -> vector<8x128xf32>
    %c0_9 = arith.constant 0 : index
    %c0_10 = arith.constant 0 : index
    %12 = vector.load %arg5[%c0_9, %c0_10] : memref<1x128xf32, #tpu.memory_space<vmem>>, vector<1x128xf32>
    %13 = vector.broadcast %12 : vector<1x128xf32> to vector<8x128xf32>
    %14 = arith.addf %11, %13 : vector<8x128xf32>
    %cst_11 = arith.constant 0.000000e+00 : f32
    %15 = vector.broadcast %cst_11 : f32 to vector<8x128xf32>
    %16 = arith.maximumf %14, %15 : vector<8x128xf32>
    %17 = arith.truncf %16 : vector<8x128xf32> to vector<8x128xbf16>
    %c0_12 = arith.constant 0 : index
    %c0_13 = arith.constant 0 : index
    %18 = vector.load %arg6[%c0_12, %c0_13] : memref<128x5xbf16, #tpu.memory_space<vmem>>, vector<128x5xbf16>
    %cst_14 = arith.constant dense<0.000000e+00> : vector<8x5xf32>
    %19 = tpu.matmul %17, %18, %cst_14 {dimension_numbers = #tpu.dot_dimension_numbers<[1], [0], [0], [1], [0, 0, 1, 1], [], []>} : vector<8x128xbf16>, vector<128x5xbf16>, vector<8x5xf32> -> vector<8x5xf32>
    %c0_15 = arith.constant 0 : index
    %c0_16 = arith.constant 0 : index
    %20 = vector.load %arg7[%c0_15, %c0_16] : memref<1x5xf32, #tpu.memory_space<vmem>>, vector<1x5xf32>
    %21 = vector.broadcast %20 : vector<1x5xf32> to vector<8x5xf32>
    %22 = arith.addf %19, %21 : vector<8x5xf32>
    %c0_17 = arith.constant 0 : index
    %c0_18 = arith.constant 0 : index
    %23 = vector.load %arg8[%c0_17, %c0_18] : memref<8x5xf32, #tpu.memory_space<vmem>>, vector<8x5xf32>
    tpu.vector_store %arg8[%c0_17, %c0_18], %22 {strides = array<i32>} : memref<8x5xf32, #tpu.memory_space<vmem>>, vector<8x5xf32>,
    %24 = tpu.iota {dimensions = array<i32: 0>} : vector<8x5xi32>
    %c8_i32 = arith.constant 8 : i32
    %25 = arith.muli %arg0, %c8_i32 : i32
    %26 = vector.broadcast %25 : i32 to vector<8x5xi32>
    %27 = arith.addi %24, %26 : vector<8x5xi32>
    %28 = tpu.iota {dimensions = array<i32: 1>} : vector<8x5xi32>
    %c8_i32_19 = arith.constant 8 : i32
    %29 = vector.broadcast %c8_i32_19 : i32 to vector<8x5xi32>
    %30 = arith.cmpi slt, %27, %29 : vector<8x5xi32>
    %c4_i32 = arith.constant 4 : i32
    %31 = vector.broadcast %c4_i32 : i32 to vector<8x5xi32>
    %32 = arith.cmpi slt, %28, %31 : vector<8x5xi32>
    %33 = arith.andi %30, %32 : vector<8x5xi1>
    %cst_20 = arith.constant 0.000000e+00 : f32
    %34 = vector.broadcast %cst_20 : f32 to vector<8x5xf32>
    %35 = arith.select %33, %22, %34 : vector<8x5xi1>, vector<8x5xf32>
    %36 = vector.shape_cast %35 : vector<8x5xf32> to vector<1x8x5xf32>
    %cst_21 = arith.constant dense<0.000000e+00> : vector<1xf32>
    %37 = vector.multi_reduction <add>, %36, %cst_21 [1, 2] : vector<1x8x5xf32> to vector<1xf32>
    %38 = vector.shape_cast %37 : vector<1xf32> to vector<1x1x1xf32>
    %39 = vector.extract %38[0, 0, 0] : f32 from vector<1x1x1xf32>
    %40 = vector.broadcast %39 : f32 to vector<1x8x128xf32>
    %c0_22 = arith.constant 0 : index
    %c0_23 = arith.constant 0 : index
    %c0_24 = arith.constant 0 : index
    %41 = vector.load %arg9[%c0_22, %c0_23, %c0_24] : memref<1x8x128xf32, #tpu.memory_space<vmem>>, vector<1x8x128xf32>
    tpu.vector_store %arg9[%c0_22, %c0_23, %c0_24], %40 {strides = array<i32>} : memref<1x8x128xf32, #tpu.memory_space<vmem>>, vector<1x8x128xf32>,
    return
  }
  func.func @transform_0(%arg0: i32) -> (i32, i32) {
    %c0_i32 = arith.constant 0 : i32
    %c0_i32_0 = arith.constant 0 : i32
    return %arg0, %c0_i32 : i32, i32
  }
  func.func @transform_1(%arg0: i32) -> (i32, i32) {
    %c0_i32 = arith.constant 0 : i32
    %c0_i32_0 = arith.constant 0 : i32
    %c0_i32_1 = arith.constant 0 : i32
    return %c0_i32, %c0_i32_0 : i32, i32
  }
  func.func @transform_2(%arg0: i32) -> (i32, i32) {
    %c0_i32 = arith.constant 0 : i32
    %c0_i32_0 = arith.constant 0 : i32
    %c0_i32_1 = arith.constant 0 : i32
    return %c0_i32, %c0_i32_0 : i32, i32
  }
  func.func @transform_3(%arg0: i32) -> (i32, i32) {
    %c0_i32 = arith.constant 0 : i32
    %c0_i32_0 = arith.constant 0 : i32
    %c0_i32_1 = arith.constant 0 : i32
    return %c0_i32, %c0_i32_0 : i32, i32
  }
  func.func @transform_4(%arg0: i32) -> (i32, i32) {
    %c0_i32 = arith.constant 0 : i32
    %c0_i32_0 = arith.constant 0 : i32
    %c0_i32_1 = arith.constant 0 : i32
    return %c0_i32, %c0_i32_0 : i32, i32
  }
  func.func @transform_5(%arg0: i32) -> (i32, i32) {
    %c0_i32 = arith.constant 0 : i32
    %c0_i32_0 = arith.constant 0 : i32
    %c0_i32_1 = arith.constant 0 : i32
    return %c0_i32, %c0_i32_0 : i32, i32
  }
  func.func @transform_6(%arg0: i32) -> (i32, i32) {
    %c0_i32 = arith.constant 0 : i32
    %c0_i32_0 = arith.constant 0 : i32
    %c0_i32_1 = arith.constant 0 : i32
    return %c0_i32, %c0_i32_0 : i32, i32
  }
  func.func @transform_7(%arg0: i32) -> (i32, i32) {
    %c0_i32 = arith.constant 0 : i32
    %c0_i32_0 = arith.constant 0 : i32
    return %arg0, %c0_i32 : i32, i32
  }
  func.func @transform_8(%arg0: i32) -> (i32, i32, i32) {
    %c0_i32 = arith.constant 0 : i32
    %c0_i32_0 = arith.constant 0 : i32
    %c0_i32_1 = arith.constant 0 : i32
    return %arg0, %c0_i32, %c0_i32_0 : i32, i32, i32
  }
}

</mosaic_0001>

<llo_original>
// kernel: tpu_custom_call.1
$region0: #{tpu_custom_call.1}
  #allocation0 [shape = 'u32[]', space=smem, size = 0x4, offset = 0x4, fixed_abs, tag = 'smem constant byte address 0x4 - core index']
  #allocation1 [shape = 'u32[72,128]{1,0:T(1,128)}', space=vmem, size = 0x9000, scoped, tag = 'internal scratch']
  %s0 = inlined_call_operand.vmem [shape: f32[8,16], index: 0, kind: input, shape index: {}]
  %s1 = inlined_call_operand.vmem [shape: bf16[16,64], index: 1, kind: input, shape index: {}]
  %s2 = inlined_call_operand.vmem [shape: f32[1,64], index: 2, kind: input, shape index: {}]
  %s3 = inlined_call_operand.vmem [shape: bf16[64,128], index: 3, kind: input, shape index: {}]
  %s4 = inlined_call_operand.vmem [shape: f32[1,128], index: 4, kind: input, shape index: {}]
  %s5 = inlined_call_operand.vmem [shape: bf16[128,5], index: 5, kind: input, shape index: {}]
  %s6 = inlined_call_operand.vmem [shape: f32[1,5], index: 6, kind: input, shape index: {}]
  %s7 = inlined_call_operand.hbm [shape: f32[8,5], index: 7, kind: output, shape index: {0}]
  %s8 = inlined_call_operand.hbm [shape: f32[1,8,128], index: 8, kind: output, shape index: {1}]
  %9 = xla_tuple %s7, %s8
  %s10 = sld [smem:[#allocation0]]
  $region46: #{tpu_custom_call.1} parent=0
    _
  %s12 = ssub.s32 1, %s10
  %s13 = scalar_select 0, %s12, %s10
  $region1: #{tpu_custom_call.1} parent=0
    #allocation2 [shape = 'u8[4096]{0}', space=vmem, size = 0x1000, scoped, tag = 'output window, operand 0, single buffered']
    #allocation3 [shape = 's32[1]{0}', space=sflag, size = 0x4, scoped, tag = 'scoped memory for tpu_custom_call.1']
    #allocation4 [shape = 'u8[4096]{0}', space=vmem, size = 0x1000, scoped, tag = 'output window, operand 1, single buffered']
    #allocation5 [shape = 's32[1]{0}', space=sflag, size = 0x4, scoped, tag = 'scoped memory for tpu_custom_call.1']
    %14 = vsyncpa [#allocation3], 0
    %15 = vsyncpa [#allocation5], 0
    // Predicated region
    $region2: #{tpu_custom_call.1} parent=1 // pred_check
      _
    $region3: #{tpu_custom_call.1} parent=1 // pred_check_branch
      %17 = sbr.rel (0) target = $region5
    $region4: #{tpu_custom_call.1} parent=1 // pred_region
      _
    $region5: #{tpu_custom_call.1} parent=1 // pred_fallthru
      _
    // Predicated region
    $region6: #{tpu_custom_call.1} parent=1 // pred_check
      _
    $region7: #{tpu_custom_call.1} parent=1 // pred_check_branch
      %19 = sbr.rel (0) target = $region9
    $region8: #{tpu_custom_call.1} parent=1 // pred_region
      _
    $region9: #{tpu_custom_call.1} parent=1 // pred_fallthru
      _
    // Predicated region
    $region10: #{tpu_custom_call.1} parent=1 // pred_check
      _
    $region11: #{tpu_custom_call.1} parent=1 // pred_check_branch
      %21 = sbr.rel (0) target = $region13
    $region12: #{tpu_custom_call.1} parent=1 // pred_region
      _
    $region13: #{tpu_custom_call.1} parent=1 // pred_fallthru
      _
    // Predicated region
    $region14: #{tpu_custom_call.1} parent=1 // pred_check
      _
    $region15: #{tpu_custom_call.1} parent=1 // pred_check_branch
      %23 = sbr.rel (0) target = $region17
    $region16: #{tpu_custom_call.1} parent=1 // pred_region
      _
    $region17: #{tpu_custom_call.1} parent=1 // pred_fallthru
      _
    // Predicated region
    $region18: #{tpu_custom_call.1} parent=1 // pred_check
      _
    $region19: #{tpu_custom_call.1} parent=1 // pred_check_branch
      %25 = sbr.rel (0) target = $region21
    $region20: #{tpu_custom_call.1} parent=1 // pred_region
      _
    $region21: #{tpu_custom_call.1} parent=1 // pred_fallthru
      _
    // Predicated region
    $region22: #{tpu_custom_call.1} parent=1 // pred_check
      _
    $region23: #{tpu_custom_call.1} parent=1 // pred_check_branch
      %27 = sbr.rel (0) target = $region25
    $region24: #{tpu_custom_call.1} parent=1 // pred_region
      _
    $region25: #{tpu_custom_call.1} parent=1 // pred_fallthru
      _
    // Predicated region
    $region26: #{tpu_custom_call.1} parent=1 // pred_check
      _
    $region27: #{tpu_custom_call.1} parent=1 // pred_check_branch
      %29 = sbr.rel (0) target = $region29
    $region28: #{tpu_custom_call.1} parent=1 // pred_region
      _
    $region29: #{tpu_custom_call.1} parent=1 // pred_fallthru
      _
    %v31 = vld [vmem:[%s0] sm:$0xff]
    %v32 = vpack.c.bf16 %v31, %v31
    %v33 = vld [vmem:[%s1] sm:$0xf]
    %v34 = vld [vmem:[%s1 + $0x4] sm:$0xf]
    %v35 = vld [vmem:[%s2] sm:$0x1]
    %v37 = vperm.slane %v35, 0
    %v41 = vunpack.c.l.b16 %v33
    %v42 = vunpack.c.l.b16 %v34
    %v43 = vpack.c.b16 %v42, %v41
    %vm45 = vcmask 130048
    %v47 = vsel %vm45, %v32, 0
    %49 = vmatpush.bf16.msra.mxu0 0
    %50 = vmatpush.bf16.msra.mxu0 0
    %51 = vmatpush.bf16.msra.mxu0 0
    %52 = vmatpush.bf16.msra.mxu0 0
    %53 = vmatpush.bf16.msra.mxu0 0
    %54 = vmatpush.bf16.msra.mxu0 0
    %55 = vmatpush.bf16.msra.mxu0 0
    %56 = vmatpush.bf16.msra.mxu0 %v43
    %57 = vmatmul.bf16.gmra.mxu0 %v47
    %v58 = vpop.f32.mrf.mxu0
    %v59 = vadd.f32 %v37, %v58
    %v60 = vpop.f32.mrf.mxu0
    %61 = vdwg.mxu0
    %v62 = vmax.f32 %v59, 0.0
    %v63 = vpack.c.bf16 %v62, %v62
    %v64 = vld [vmem:[%s3] sm:$0xf]
    %v65 = vld [vmem:[%s3 + $0x4] sm:$0xf]
    %v66 = vld [vmem:[%s3 + $0x8] sm:$0xf]
    %v67 = vld [vmem:[%s3 + $0xc] sm:$0xf]
    %v68 = vld [vmem:[%s3 + $0x10] sm:$0xf]
    %v69 = vld [vmem:[%s3 + $0x14] sm:$0xf]
    %v70 = vld [vmem:[%s3 + $0x18] sm:$0xf]
    %v71 = vld [vmem:[%s3 + $0x1c] sm:$0xf]
    %v72 = vld [vmem:[%s4] sm:$0x1]
    %v74 = vperm.slane %v72, 0
    %v84 = vunpack.c.l.b16 %v64
    %v85 = vunpack.c.l.b16 %v65
    %v86 = vunpack.c.l.b16 %v66
    %v87 = vunpack.c.l.b16 %v67
    %v88 = vunpack.c.l.b16 %v68
    %v89 = vunpack.c.l.b16 %v69
    %v90 = vunpack.c.l.b16 %v70
    %v91 = vunpack.c.l.b16 %v71
    %v92 = vpack.c.b16 %v85, %v84
    %v93 = vpack.c.b16 %v87, %v86
    %v94 = vpack.c.b16 %v89, %v88
    %v95 = vpack.c.b16 %v91, %v90
    %vm100 = vcmask 523264
    %v102 = vsel %vm100, %v63, 0
    %104 = vmatpush.bf16.msra.mxu0 0
    %105 = vmatpush.bf16.msra.mxu0 0
    %106 = vmatpush.bf16.msra.mxu0 0
    %107 = vmatpush.bf16.msra.mxu0 0
    %108 = vmatpush.bf16.msra.mxu0 %v95
    %109 = vmatpush.bf16.msra.mxu0 %v94
    %110 = vmatpush.bf16.msra.mxu0 %v93
    %111 = vmatpush.bf16.msra.mxu0 %v92
    %112 = vmatmul.bf16.gmra.mxu0 %v102
    %v113 = vpop.f32.mrf.mxu0
    %v114 = vadd.f32 %v74, %v113
    %v115 = vpop.f32.mrf.mxu0
    %116 = vdwg.mxu0
    %v117 = vmax.f32 %v114, 0.0
    %v118 = vpack.c.bf16 %v117, %v117
    %v119 = vld [vmem:[%s5] sm:$0xf]
    %v120 = vld [vmem:[%s5 + $0x4] sm:$0xf]
    %v121 = vld [vmem:[%s5 + $0x8] sm:$0xf]
    %v122 = vld [vmem:[%s5 + $0xc] sm:$0xf]
    %v123 = vld [vmem:[%s5 + $0x10] sm:$0xf]
    %v124 = vld [vmem:[%s5 + $0x14] sm:$0xf]
    %v125 = vld [vmem:[%s5 + $0x18] sm:$0xf]
    %v126 = vld [vmem:[%s5 + $0x1c] sm:$0xf]
    %v127 = vld [vmem:[%s5 + $0x20] sm:$0xf]
    %v128 = vld [vmem:[%s5 + $0x24] sm:$0xf]
    %v129 = vld [vmem:[%s5 + $0x28] sm:$0xf]
    %v130 = vld [vmem:[%s5 + $0x2c] sm:$0xf]
    %v131 = vld [vmem:[%s5 + $0x30] sm:$0xf]
    %v132 = vld [vmem:[%s5 + $0x34] sm:$0xf]
    %v133 = vld [vmem:[%s5 + $0x38] sm:$0xf]
    %v134 = vld [vmem:[%s5 + $0x3c] sm:$0xf]
    %v135 = vld [vmem:[%s6] sm:$0x1]
    %v137 = vperm.slane %v135, 0
    %v155 = vunpack.c.l.b16 %v119
    %v156 = vunpack.c.l.b16 %v120
    %v157 = vunpack.c.l.b16 %v121
    %v158 = vunpack.c.l.b16 %v122
    %v159 = vunpack.c.l.b16 %v123
    %v160 = vunpack.c.l.b16 %v124
    %v161 = vunpack.c.l.b16 %v125
    %v162 = vunpack.c.l.b16 %v126
    %v163 = vunpack.c.l.b16 %v127
    %v164 = vunpack.c.l.b16 %v128
    %v165 = vunpack.c.l.b16 %v129
    %v166 = vunpack.c.l.b16 %v130
    %v167 = vunpack.c.l.b16 %v131
    %v168 = vunpack.c.l.b16 %v132
    %v169 = vunpack.c.l.b16 %v133
    %v170 = vunpack.c.l.b16 %v134
    %v171 = vpack.c.b16 %v156, %v155
    %v172 = vpack.c.b16 %v158, %v157
    %v173 = vpack.c.b16 %v160, %v159
    %v174 = vpack.c.b16 %v162, %v161
    %v175 = vpack.c.b16 %v164, %v163
    %v176 = vpack.c.b16 %v166, %v165
    %v177 = vpack.c.b16 %v168, %v167
    %v178 = vpack.c.b16 %v170, %v169
    %187 = vmatpush.bf16.msra.mxu0 %v178
    %188 = vmatpush.bf16.msra.mxu0 %v177
    %189 = vmatpush.bf16.msra.mxu0 %v176
    %190 = vmatpush.bf16.msra.mxu0 %v175
    %191 = vmatpush.bf16.msra.mxu0 %v174
    %192 = vmatpush.bf16.msra.mxu0 %v173
    %193 = vmatpush.bf16.msra.mxu0 %v172
    %194 = vmatpush.bf16.msra.mxu0 %v171
    %195 = vmatmul.bf16.gmra.mxu0 %v118
    %v196 = vpop.f32.mrf.mxu0
    %v197 = vadd.f32 %v137, %v196
    %v198 = vpop.f32.mrf.mxu0
    %199 = vdwg.mxu0
    %vm200 = vcmask 39936
    %201 = vst.msk [vmem:[#allocation2] sm:$0xff] %vm200, %v197
    %v202 = vlaneseq
    %v203 = vshrl.u32 %v202, 7
    %s204 = smul.u32 0, 8
    %v205 = vstv %s204
    %v206 = vadd.s32 %v203, %v205
    %v207 = vlaneseq
    %v208 = vand.u32 %v207, 127
    %vm209 = vcmp.lt.s32.totalorder %v206, 8
    %vm210 = vcmp.lt.s32.totalorder %v208, 4
    %vm211 = vmand %vm209, %vm210
    %v212 = vsel %vm211, %v197, 0.0
    %v213 = vsel %vm200, %v212, 0.0
    %214 = vadd.xlane.f32.xlu0 %v213
    %v215 = vpop.xlane.xlu0 %214
    %v216 = vrot.slane %v215, 4
    %v217 = vadd.f32 %v215, %v216
    %v218 = vrot.slane %v217, 2
    %v219 = vadd.f32 %v217, %v218
    %v220 = vrot.slane %v219, 1
    %v221 = vadd.f32 %v219, %v220
    %s222 = vtos %v221
    %v223 = vstv %s222
    %224 = vst [vmem:[#allocation4] sm:$0xff] %v223
    // Predicated region
    $region30: #{tpu_custom_call.1} parent=1 // pred_check
      _
    $region31: #{tpu_custom_call.1} parent=1 // pred_check_branch
      %226 = sbr.rel (0) target = $region33
    $region32: #{tpu_custom_call.1} parent=1 // pred_region
      %228 = vsyncadd [#allocation3], 0
      %s230 = sshll.u32 [#allocation2], 4
      %s231 = int_to_ptr.vmem [resolvable:$true] %s230
      %s232 = sshll.u32 %s7, 4
      %s233 = int_to_ptr.hbm [resolvable:$true] %s232
      %235 = dma.vmem_to_hbm [thread:$0]  %s231, 128, %s233, [#allocation3]
    $region33: #{tpu_custom_call.1} parent=1 // pred_fallthru
      _
    // Predicated region
    $region34: #{tpu_custom_call.1} parent=1 // pred_check
      _
    $region35: #{tpu_custom_call.1} parent=1 // pred_check_branch
      %237 = sbr.rel (0) target = $region37
    $region36: #{tpu_custom_call.1} parent=1 // pred_region
      %239 = vsyncadd [#allocation5], 0
      %s241 = sshll.u32 [#allocation4], 4
      %s242 = int_to_ptr.vmem [resolvable:$true] %s241
      %s243 = sshll.u32 %s8, 4
      %s244 = int_to_ptr.hbm [resolvable:$true] %s243
      %246 = dma.vmem_to_hbm [thread:$0]  %s242, 128, %s244, [#allocation5]
    $region37: #{tpu_custom_call.1} parent=1 // pred_fallthru
      _
    // Predicated region
    $region38: #{tpu_custom_call.1} parent=1 // pred_check
      _
    $region39: #{tpu_custom_call.1} parent=1 // pred_check_branch
      %248 = sbr.rel (0) target = $region41
    $region40: #{tpu_custom_call.1} parent=1 // pred_region
      %250 = dma.done [#allocation3], 128
    $region41: #{tpu_custom_call.1} parent=1 // pred_fallthru
      _
    // Predicated region
    $region42: #{tpu_custom_call.1} parent=1 // pred_check
      _
    $region43: #{tpu_custom_call.1} parent=1 // pred_check_branch
      %252 = sbr.rel (0) target = $region45
    $region44: #{tpu_custom_call.1} parent=1 // pred_region
      %254 = dma.done [#allocation5], 128
    $region45: #{tpu_custom_call.1} parent=1 // pred_fallthru
      _
    %255 = vsyncpa [#allocation3], 1
    %256 = vsyncpa [#allocation5], 1

</llo_original>
